<compile_context>
chip_gen: v7x
topology: tpu7x:2x2x1
jax: 0.10.0
libtpu: 0.0.40
codegen_flags: <defaults>
</compile_context>

<pallas_src>
import jax
import jax.numpy as jnp
from jax.experimental import pallas as pl
from jax.experimental.pallas import tpu as pltpu

_IN = 30
_OUT = 10
_BIAS_ROW = 32          # 8-sublane-aligned offset for the bias row
_PACK_ROWS = 40         # 30 rows of W^T + padding + 1 bias row, padded to 40


def _linear_clamp_kernel(x_ref, wb_ref, o_ref):
    # x_ref: (B, 30)   wb_ref: (40, 10) packed [W^T ; pad ; bias]   o_ref: (B, 10)
    wb = wb_ref[...]                      # single load of the packed params
    w = wb[:_IN, :]                       # (30, 10), in-register slice
    b = wb[_BIAS_ROW:_BIAS_ROW + 1, :]    # (1, 10), 8-sublane-aligned row
    y = jnp.dot(x_ref[...], w, preferred_element_type=jnp.float32)
    y = jnp.clip(y + b, -0.25, 0.5)       # bias + clamp_min + clamp_max, one VPU pass
    o_ref[...] = y.astype(o_ref.dtype)


def make_linear_clamp(weight, bias):
    """weight: (out, in) PyTorch convention, bias: (out,).

    Packs W^T and bias into one buffer exactly once and returns a jitted
    forward whose only op is the pallas_call (2 input DMAs, 1 output DMA).
    """
    out_f, in_f = weight.shape
    wb = jnp.zeros((_PACK_ROWS, out_f), dtype=jnp.float32)
    wb = wb.at[:in_f, :].set(jnp.asarray(weight, dtype=jnp.float32).T)   # rows 0..29: W^T
    wb = wb.at[_BIAS_ROW, :].set(jnp.asarray(bias, dtype=jnp.float32))   # row 32: bias

    @jax.jit
    def fwd(x):
        B = x.shape[0]
        cost = pl.CostEstimate(
            flops=2 * B * in_f * out_f,
            transcendentals=0,
            bytes_accessed=4 * (B * in_f + _PACK_ROWS * out_f + B * out_f),
        )
        return pl.pallas_call(
            _linear_clamp_kernel,
            out_shape=jax.ShapeDtypeStruct((B, out_f), x.dtype),
            in_specs=[
                pl.BlockSpec(memory_space=pltpu.VMEM),  # x, whole array
                pl.BlockSpec(memory_space=pltpu.VMEM),  # packed [W^T ; bias]
            ],
            out_specs=pl.BlockSpec(memory_space=pltpu.VMEM),
            cost_estimate=cost,
        )(x, wb)

    return fwd


if __name__ == "__main__":
    key = jax.random.PRNGKey(0)
    kx, kw, kb = jax.random.split(key, 3)

    B, IN, OUT = 1, _IN, _OUT
    x1 = jax.random.normal(kx, (B, IN), dtype=jnp.float32)

    # Deterministic "PyTorch-like" Linear init: U(-1/sqrt(in), 1/sqrt(in))
    bound = 1.0 / (IN ** 0.5)
    weight = jax.random.uniform(kw, (OUT, IN), dtype=jnp.float32,
                                minval=-bound, maxval=bound)
    bias = jax.random.uniform(kb, (OUT,), dtype=jnp.float32,
                              minval=-bound, maxval=bound)

    fwd = make_linear_clamp(weight, bias)
    out = jax.block_until_ready(fwd(x1))

    # Reference check in plain JAX
    ref = jnp.clip(x1 @ weight.T + bias, -0.25, 0.5)
    assert out.shape == (B, OUT)
    assert jnp.allclose(out, ref, atol=1e-5, rtol=1e-5)

    print("KERNEL_OK")
</pallas_src>

<mosaic_0001>
module attributes {stable_mosaic.version = 11 : i64} {
  func.func @_linear_clamp_kernel(%arg0: memref<1x30xf32, #tpu.memory_space<vmem>>, %arg1: memref<40x10xf32, #tpu.memory_space<vmem>>, %arg2: memref<1x10xf32, #tpu.memory_space<vmem>>) attributes {dimension_semantics = [], scalar_prefetch = 0 : i64, scratch_operands = 0 : i64, tpu.core_type = #tpu.core_type<tc>} {
    %c0 = arith.constant 0 : index
    %c0_0 = arith.constant 0 : index
    %0 = vector.load %arg1[%c0, %c0_0] : memref<40x10xf32, #tpu.memory_space<vmem>>, vector<40x10xf32>
    %1 = vector.extract_strided_slice %0 {offsets = [0, 0], sizes = [30, 10], strides = [1, 1]} : vector<40x10xf32> to vector<30x10xf32>
    %2 = vector.extract_strided_slice %0 {offsets = [32, 0], sizes = [1, 10], strides = [1, 1]} : vector<40x10xf32> to vector<1x10xf32>
    %c0_1 = arith.constant 0 : index
    %c0_2 = arith.constant 0 : index
    %3 = vector.load %arg0[%c0_1, %c0_2] : memref<1x30xf32, #tpu.memory_space<vmem>>, vector<1x30xf32>
    %cst = arith.constant dense<0.000000e+00> : vector<1x10xf32>
    %4 = tpu.matmul %3, %1, %cst {dimension_numbers = #tpu.dot_dimension_numbers<[1], [0], [0], [1], [0, 0, 1, 1], [], []>} : vector<1x30xf32>, vector<30x10xf32>, vector<1x10xf32> -> vector<1x10xf32>
    %5 = arith.addf %4, %2 : vector<1x10xf32>
    %cst_3 = arith.constant -2.500000e-01 : f32
    %cst_4 = arith.constant 5.000000e-01 : f32
    %6 = vector.broadcast %cst_3 : f32 to vector<1x10xf32>
    %7 = arith.maximumf %6, %5 : vector<1x10xf32>
    %8 = vector.broadcast %cst_4 : f32 to vector<1x10xf32>
    %9 = arith.minimumf %8, %7 : vector<1x10xf32>
    %c0_5 = arith.constant 0 : index
    %c0_6 = arith.constant 0 : index
    %10 = vector.load %arg2[%c0_5, %c0_6] : memref<1x10xf32, #tpu.memory_space<vmem>>, vector<1x10xf32>
    tpu.vector_store %arg2[%c0_5, %c0_6], %9 {strides = array<i32>} : memref<1x10xf32, #tpu.memory_space<vmem>>, vector<1x10xf32>,
    return
  }
}

</mosaic_0001>

<llo_original>
// kernel: fwd.1
$region0: #{fwd.1}
  #allocation0 [shape = 'u32[]', space=smem, size = 0x4, offset = 0x4, fixed_abs, tag = 'smem constant byte address 0x4 - core index']
  #allocation1 [shape = 'u32[144,128]{1,0:T(1,128)}', space=vmem, size = 0x12000, scoped, tag = 'internal scratch']
  %s0 = inlined_call_operand.hbm [shape: f32[1,30], index: 0, kind: input, shape index: {}]
  %s1 = inlined_call_operand.hbm [shape: f32[40,10], index: 1, kind: input, shape index: {}]
  %s2 = inlined_call_operand.hbm [shape: f32[1,10], index: 2, kind: output, shape index: {}]
  %s3 = sld [smem:[#allocation0]]
  $region26: #{fwd.1} parent=0
    _
  %s5 = ssub.s32 1, %s3
  %s6 = scalar_select 0, %s5, %s3
  $region1: #{fwd.1} parent=0
    #allocation2 [shape = 'u8[512]{0}', space=vmem, size = 0x400, scoped, tag = 'input window, operand 0, single buffered']
    #allocation3 [shape = 's32[1]{0}', space=sflag, size = 0x4, scoped, tag = 'scoped memory for fwd.1']
    #allocation4 [shape = 's32[1]{0}', space=sflag, size = 0x4, scoped, tag = 'scoped memory for fwd.1']
    #allocation5 [shape = 'u8[20480]{0}', space=vmem, size = 0x5000, scoped, tag = 'input window, operand 1, single buffered']
    #allocation6 [shape = 's32[1]{0}', space=sflag, size = 0x4, scoped, tag = 'scoped memory for fwd.1']
    #allocation7 [shape = 'u8[512]{0}', space=vmem, size = 0x400, scoped, tag = 'output window, operand 0, single buffered']
    %7 = vsyncpa [#allocation3], 0
    %8 = vsyncpa [#allocation6], 0
    %9 = vsyncpa [#allocation4], 0
    // Predicated region
    $region2: #{fwd.1} parent=1 // pred_check
      _
    $region3: #{fwd.1} parent=1 // pred_check_branch
      %11 = sbr.rel (0) target = $region5
    $region4: #{fwd.1} parent=1 // pred_region
      %s13 = ssub.s32 16, 16
      %14 = vsyncadd [#allocation3], %s13
      %s16 = sshll.u32 [#allocation2], 4
      %s17 = int_to_ptr.vmem [resolvable:$true] %s16
      %19 = dma.hbm_to_vmem [thread:$0]  %s0, 16, %s17, [#allocation3]
    $region5: #{fwd.1} parent=1 // pred_fallthru
      _
    // Predicated region
    $region6: #{fwd.1} parent=1 // pred_check
      _
    $region7: #{fwd.1} parent=1 // pred_check_branch
      %21 = sbr.rel (0) target = $region9
    $region8: #{fwd.1} parent=1 // pred_region
      %s23 = ssub.s32 640, 640
      %24 = vsyncadd [#allocation6], %s23
      %s25 = sshll.u32 [#allocation5], 4
      %s26 = int_to_ptr.vmem [resolvable:$true] %s25
      %31 = dma.hbm_to_vmem [thread:$0]  %s1, 640, %s26, [#allocation6], 128, 128, 8
    $region9: #{fwd.1} parent=1 // pred_fallthru
      _
    // Predicated region
    $region10: #{fwd.1} parent=1 // pred_check
      _
    $region11: #{fwd.1} parent=1 // pred_check_branch
      %33 = sbr.rel (0) target = $region13
    $region12: #{fwd.1} parent=1 // pred_region
      %34 = dma.done [#allocation3], 16
    $region13: #{fwd.1} parent=1 // pred_fallthru
      _
    // Predicated region
    $region14: #{fwd.1} parent=1 // pred_check
      _
    $region15: #{fwd.1} parent=1 // pred_check_branch
      %36 = sbr.rel (0) target = $region17
    $region16: #{fwd.1} parent=1 // pred_region
      %37 = dma.done [#allocation6], 640
    $region17: #{fwd.1} parent=1 // pred_fallthru
      _
    %v38 = vld [vmem:[#allocation5] sm:$0xff]
    %v39 = vld [vmem:[#allocation5 + $0x8] sm:$0xff]
    %v40 = vld [vmem:[#allocation5 + $0x10] sm:$0xff]
    %v41 = vld [vmem:[#allocation5 + $0x18] sm:$0xff]
    %v42 = vld [vmem:[#allocation5 + $0x20] sm:$0xff]
    %v43 = vld [vmem:[#allocation2] sm:$0x1]
    %vm44 = vcmask 244736
    %v46 = vsel %vm44, %v43, 0
    %vm48 = vcmask 1045504
    %v50 = vsel %vm48, %v41, 0
    %52 = vmatprep.subr.mxu0 0.0
    %53 = vmatpush1.msra.mxu0 %v38
    %54 = vmatprep.subr.mxu0 0.0
    %55 = vmatpush1.msra.mxu0 %v39
    %56 = vmatprep.subr.mxu0 0.0
    %57 = vmatpush1.msra.mxu0 %v40
    %58 = vmatprep.subr.mxu0 0.0
    %59 = vmatpush1.msra.mxu0 %v50
    %60 = vmatprep.subr.mxu0 0.0
    %61 = vmatpush1.msra.mxu0 0.0
    %62 = vmatprep.subr.mxu0 0.0
    %63 = vmatpush1.msra.mxu0 0.0
    %64 = vmatprep.subr.mxu0 0.0
    %65 = vmatpush1.msra.mxu0 0.0
    %66 = vmatprep.subr.mxu0 0.0
    %67 = vmatpush1.msra.mxu0 0.0
    %68 = vmatprep.subr.mxu0 0.0
    %69 = vmatpush1.msra.mxu0 0.0
    %70 = vmatprep.subr.mxu0 0.0
    %71 = vmatpush1.msra.mxu0 0.0
    %72 = vmatprep.subr.mxu0 0.0
    %73 = vmatpush1.msra.mxu0 0.0
    %74 = vmatprep.subr.mxu0 0.0
    %75 = vmatpush1.msra.mxu0 0.0
    %76 = vmatprep.subr.mxu0 0.0
    %77 = vmatpush1.msra.mxu0 0.0
    %78 = vmatprep.subr.mxu0 0.0
    %79 = vmatpush1.msra.mxu0 0.0
    %80 = vmatprep.subr.mxu0 0.0
    %81 = vmatpush1.msra.mxu0 0.0
    %82 = vmatprep.subr.mxu0 0.0
    %83 = vmatpush1.msra.mxu0 0.0
    %84 = vmatprep.subr.mxu0 0.0
    %85 = vmatpush1.msra.mxu0 0.0
    %86 = vmatprep.subr.mxu0 0.0
    %87 = vmatpush1.msra.mxu0 0.0
    %88 = vmatprep.subr.mxu0 0.0
    %89 = vmatpush1.msra.mxu0 0.0
    %90 = vmatprep.subr.mxu0 0.0
    %91 = vmatpush1.msra.mxu0 0.0
    %92 = vmatprep.subr.mxu0 0.0
    %93 = vmatpush1.msra.mxu0 0.0
    %94 = vmatprep.subr.mxu0 0.0
    %95 = vmatpush1.msra.mxu0 0.0
    %96 = vmatprep.subr.mxu0 0.0
    %97 = vmatpush1.msra.mxu0 0.0
    %98 = vmatprep.subr.mxu0 0.0
    %99 = vmatpush1.msra.mxu0 0.0
    %100 = vmatprep.subr.mxu0 0.0
    %101 = vmatpush1.msra.mxu0 0.0
    %102 = vmatprep.subr.mxu0 0.0
    %103 = vmatpush1.msra.mxu0 0.0
    %104 = vmatprep.subr.mxu0 0.0
    %105 = vmatpush1.msra.mxu0 0.0
    %106 = vmatprep.subr.mxu0 0.0
    %107 = vmatpush1.msra.mxu0 0.0
    %108 = vmatprep.subr.mxu0 0.0
    %109 = vmatpush1.msra.mxu0 0.0
    %110 = vmatprep.subr.mxu0 0.0
    %111 = vmatpush1.msra.mxu0 0.0
    %112 = vmatprep.subr.mxu0 0.0
    %113 = vmatpush1.msra.mxu0 0.0
    %114 = vmatprep.subr.mxu0 0.0
    %115 = vmatpush1.msra.mxu0 0.0
    %116 = vmatprep.mubr.f32.mxu0 0.0
    %117 = vmatmul.mubr.f32.gmra.mrb[0].mxu0 %v46
    %v118 = vpop.f32.mrb[0].mxu0
    %v119 = vadd.f32 %v42, %v118
    %v120 = vpop.f32.mrb[0].mxu0
    %121 = vdwg.mxu0
    %v122 = vmax.f32 %v119, -0.25
    %v123 = vmin.f32 %v122, 0.5
    %vm124 = vcmask 73728
    %125 = vst.msk [vmem:[#allocation7] sm:$0x1] %vm124, %v123
    // Predicated region
    $region18: #{fwd.1} parent=1 // pred_check
      _
    $region19: #{fwd.1} parent=1 // pred_check_branch
      %127 = sbr.rel (0) target = $region21
    $region20: #{fwd.1} parent=1 // pred_region
      %s129 = ssub.s32 16, 16
      %130 = vsyncadd [#allocation4], %s129
      %s132 = sshll.u32 [#allocation7], 4
      %s133 = int_to_ptr.vmem [resolvable:$true] %s132
      %135 = dma.vmem_to_hbm [thread:$0]  %s133, 16, %s2, [#allocation4]
    $region21: #{fwd.1} parent=1 // pred_fallthru
      _
    // Predicated region
    $region22: #{fwd.1} parent=1 // pred_check
      _
    $region23: #{fwd.1} parent=1 // pred_check_branch
      %137 = sbr.rel (0) target = $region25
    $region24: #{fwd.1} parent=1 // pred_region
      %138 = dma.done [#allocation4], 16
    $region25: #{fwd.1} parent=1 // pred_fallthru
      _
    %139 = vsyncpa [#allocation3], 1
    %140 = vsyncpa [#allocation6], 1
    %141 = vsyncpa [#allocation4], 1

</llo_original>
